<compile_context>
chip_gen: v5e
topology: v5e:2x2
jax: 0.10.0
libtpu: 0.0.40
codegen_flags: <defaults>
</compile_context>

<pallas_src>
import jax
import jax.numpy as jnp
from jax.experimental import pallas as pl
from jax.experimental.pallas import tpu as pltpu

LANE = 128


def _round_up(x, m):
    return (x + m - 1) // m * m


def _vmem_limit_bytes():
    # ~75% of physical VMEM (96 MiB on v5e/v6e, 48 MiB on v7x); safe 48 MiB fallback.
    try:
        cap = pltpu.get_tpu_info().vmem_capacity_bytes
    except Exception:
        cap = 64 * 1024 * 1024
    return min(int(cap * 3 // 4), 100 * 1024 * 1024)


def _bn_swish_epilogue(acc, scale, shift, out_dtype):
    """Folded BatchNorm + Swish.  sigmoid via EUP tanh (stable for all z)."""
    z = acc * scale + shift
    y = z * (jnp.tanh(z * 0.5) * 0.5 + 0.5)
    return y.astype(out_dtype)


# ----------------------------------------------------------------------------------
# Kernel 1: joint-packed GEMM path (small Cin).
# ----------------------------------------------------------------------------------
def _gemm_kernel(p_ref, w_ref, scale_ref, shift_ref, o_ref):
    """One (batch, row-strip, cout-tile) grid step.

    p_ref:     (1, SM, Kp)  im2col patch strip, (tap, cin) jointly packed, bf16
    w_ref:     (Kp, TC)     folded conv weights, bf16
    scale_ref: (1, TC)      gamma / sqrt(var + eps), f32
    shift_ref: (1, TC)      beta - mean * scale,     f32
    o_ref:     (1, SM, TC)  output strip, bf16
    """
    acc = jnp.dot(p_ref[0], w_ref[...], preferred_element_type=jnp.float32)
    o_ref[0] = _bn_swish_epilogue(acc, scale_ref[...], shift_ref[...], o_ref.dtype)


# ----------------------------------------------------------------------------------
# Kernel 2: per-tap split-K path (general Cin).  No im2col concat is materialized:
# each tap is a static row-shifted view of the flat-row-halo slab, contracted with
# its own (C1, TC) weight slice and accumulated in f32.
# ----------------------------------------------------------------------------------
def _tap_kernel(x_ref, w_ref, scale_ref, shift_ref, o_ref):
    """One (batch, cout-tile) grid step.

    x_ref:     (1, MEXT, C1)     flattened padded image + flat-row halo, bf16
    w_ref:     (9, C1, TC)       per-tap folded conv weights, bf16
    scale_ref: (1, TC)           f32
    shift_ref: (1, TC)           f32
    o_ref:     (1, HP, WP, TC)   padded output (interior sliced in the wrapper), bf16
    """
    hp, wp = o_ref.shape[1], o_ref.shape[2]
    m = hp * wp                   # rows of the flattened (padded) image
    woff = wp + 1                 # halo offset = largest backward tap shift

    acc = None
    tap = 0
    for kh in range(3):
        for kw in range(3):
            d = (kh - 1) * wp + (kw - 1)
            xv = x_ref[0, woff + d:woff + d + m, :]          # static row-shifted view
            part = jnp.dot(xv, w_ref[tap], preferred_element_type=jnp.float32)
            acc = part if acc is None else acc + part
            tap += 1

    y = _bn_swish_epilogue(acc, scale_ref[...], shift_ref[...], o_ref.dtype)
    o_ref[...] = y.reshape(o_ref.shape)


# ----------------------------------------------------------------------------------
# Wrappers
# ----------------------------------------------------------------------------------
def _forward_gemm(x_nchw, weight_oihw, scale, shift, tc):
    B, Cin, H, W = x_nchw.shape
    Cout = weight_oihw.shape[0]
    C2 = _round_up(Cout, LANE)
    Kp = _round_up(9 * Cin, LANE)

    # Joint (tap, cin) im2col in the wrapper: with 9*Cin <= 128 the patch is no wider
    # than a channel-padded slab would be, so there is no HBM inflation.
    x = jnp.transpose(x_nchw, (0, 2, 3, 1)).astype(jnp.bfloat16)           # NHWC
    xp = jnp.pad(x, ((0, 0), (1, 1), (1, 1), (0, 0)))
    taps = [xp[:, kh:kh + H, kw:kw + W, :] for kh in range(3) for kw in range(3)]
    patch = jnp.concatenate(taps, axis=-1).reshape(B, H * W, 9 * Cin)

    # Strip-tile the pixel axis so the grid has enough steps to pipeline / shard.
    mo_raw = H * W
    sm = 512 if mo_raw >= 512 else _round_up(mo_raw, 8)
    mo = _round_up(mo_raw, sm)
    patch = jnp.pad(patch, ((0, 0), (0, mo - mo_raw), (0, Kp - 9 * Cin)))

    # Weights: OIHW -> HWIO -> (9*Cin, Cout), tap-major (matches the patch packing).
    w = jnp.transpose(weight_oihw, (2, 3, 1, 0)).astype(jnp.bfloat16)
    w = w.reshape(9 * Cin, Cout)
    w = jnp.pad(w, ((0, Kp - 9 * Cin), (0, C2 - Cout)))

    out = pl.pallas_call(
        _gemm_kernel,
        out_shape=jax.ShapeDtypeStruct((B, mo, C2), jnp.bfloat16),
        grid_spec=pltpu.PrefetchScalarGridSpec(
            num_scalar_prefetch=0,
            grid=(B, mo // sm, C2 // tc),
            in_specs=[
                pl.BlockSpec((1, sm, Kp), lambda b, s, c: (b, s, 0)),
                pl.BlockSpec((Kp, tc), lambda b, s, c: (0, c)),
                pl.BlockSpec((1, tc), lambda b, s, c: (0, c)),
                pl.BlockSpec((1, tc), lambda b, s, c: (0, c)),
            ],
            out_specs=pl.BlockSpec((1, sm, tc), lambda b, s, c: (b, s, c)),
        ),
        compiler_params=pltpu.CompilerParams(
            dimension_semantics=("parallel", "parallel", "parallel"),
            vmem_limit_bytes=_vmem_limit_bytes()),
    )(patch, w, scale, shift)

    out = out[:, :mo_raw, :Cout].reshape(B, H, W, Cout)
    return jnp.transpose(out, (0, 3, 1, 2))


def _forward_tap(x_nchw, weight_oihw, scale, shift, tc):
    B, Cin, H, W = x_nchw.shape
    Cout = weight_oihw.shape[0]
    C1 = _round_up(Cin, LANE)
    C2 = _round_up(Cout, LANE)
    HP = H + 2                       # 1-row zero halo top/bottom
    WP = _round_up(W + 2, 8)         # 1-col zero halo left, pad width to 8-aligned
    M = HP * WP
    WOFF = WP + 1                    # flat-row halo so every tap view is in-bounds
    MEXT = M + 2 * WOFF

    x = jnp.transpose(x_nchw, (0, 2, 3, 1)).astype(jnp.bfloat16)
    x = jnp.pad(x, ((0, 0), (1, 1), (1, WP - W - 1), (0, C1 - Cin)))
    x = x.reshape(B, M, C1)
    x = jnp.pad(x, ((0, 0), (WOFF, WOFF), (0, 0)))               # (B, MEXT, C1)

    w = jnp.transpose(weight_oihw, (2, 3, 1, 0)).astype(jnp.bfloat16)   # (3,3,Cin,Cout)
    w = jnp.pad(w, ((0, 0), (0, 0), (0, C1 - Cin), (0, C2 - Cout)))
    w = w.reshape(9, C1, C2)          # per-tap weight slices

    out = pl.pallas_call(
        _tap_kernel,
        out_shape=jax.ShapeDtypeStruct((B, HP, WP, C2), jnp.bfloat16),
        grid_spec=pltpu.PrefetchScalarGridSpec(
            num_scalar_prefetch=0,
            grid=(B, C2 // tc),
            in_specs=[
                pl.BlockSpec((1, MEXT, C1), lambda b, c: (b, 0, 0)),
                pl.BlockSpec((9, C1, tc), lambda b, c: (0, 0, c)),
                pl.BlockSpec((1, tc), lambda b, c: (0, c)),
                pl.BlockSpec((1, tc), lambda b, c: (0, c)),
            ],
            out_specs=pl.BlockSpec((1, HP, WP, tc), lambda b, c: (b, 0, 0, c)),
        ),
        compiler_params=pltpu.CompilerParams(
            dimension_semantics=("parallel", "parallel"),
            vmem_limit_bytes=_vmem_limit_bytes()),
    )(x, w, scale, shift)

    out = out[:, 1:H + 1, 1:W + 1, :Cout]
    return jnp.transpose(out, (0, 3, 1, 2))


def conv_block_forward(x_nchw, weight_oihw, gamma, beta, running_mean,
                       running_var, eps=1e-5):
    """ConvBlock forward (stride=1, padding=1, swish). NCHW in, NCHW bf16 out."""
    Cin = x_nchw.shape[1]
    Cout = weight_oihw.shape[0]
    C2 = _round_up(Cout, LANE)

    # Fold BatchNorm (eval running stats) into per-out-channel scale/shift.
    scale = (gamma / jnp.sqrt(running_var + eps)).astype(jnp.float32)
    shift = (beta - running_mean * scale).astype(jnp.float32)
    scale = jnp.pad(scale, (0, C2 - Cout)).reshape(1, C2)
    shift = jnp.pad(shift, (0, C2 - Cout)).reshape(1, C2)

    # Out-channel tile: 256 fills the 2x256^2 MXU on v6e/v7x; 128 otherwise
    # (128 already matches v5e's 4x128^2 MXU).
    tc = 256 if C2 % 256 == 0 else 128

    if 9 * Cin <= LANE:
        return _forward_gemm(x_nchw, weight_oihw, scale, shift, tc)
    return _forward_tap(x_nchw, weight_oihw, scale, shift, tc)


# ----------------------------------------------------------------------------------
# Reference + test
# ----------------------------------------------------------------------------------
def _reference(x_nchw, weight_oihw, gamma, beta, running_mean, running_var,
               eps=1e-5):
    """Pure-JAX reference.  Inputs are pre-rounded to bf16 (like the kernel's MXU
    operands) so the check isolates kernel correctness from bf16 quantization."""
    xb = x_nchw.astype(jnp.bfloat16).astype(jnp.float32)
    wb = weight_oihw.astype(jnp.bfloat16).astype(jnp.float32)
    out = jax.lax.conv_general_dilated(
        xb, wb, window_strides=(1, 1), padding=((1, 1), (1, 1)),
        dimension_numbers=("NCHW", "OIHW", "NCHW"))
    scale = (gamma / jnp.sqrt(running_var + eps)).reshape(1, -1, 1, 1)
    shift = (beta - running_mean * gamma / jnp.sqrt(running_var + eps)).reshape(1, -1, 1, 1)
    z = out * scale + shift
    return z * jax.nn.sigmoid(z)


def _run_case(key, B, Cin, Cout, H, W, atol=2e-2, rtol=2e-2):
    k_x, k_w, k_g, k_b, k_m, k_v = jax.random.split(key, 6)
    x = jax.random.normal(k_x, (B, Cin, H, W), dtype=jnp.float32)
    weight = jax.random.normal(k_w, (Cout, Cin, 3, 3), dtype=jnp.float32) * 0.1
    gamma = jax.random.uniform(k_g, (Cout,), dtype=jnp.float32, minval=0.5, maxval=1.5)
    beta = jax.random.normal(k_b, (Cout,), dtype=jnp.float32) * 0.1
    running_mean = jax.random.normal(k_m, (Cout,), dtype=jnp.float32) * 0.1
    running_var = jax.random.uniform(k_v, (Cout,), dtype=jnp.float32,
                                     minval=0.5, maxval=1.5)

    out = conv_block_forward(x, weight, gamma, beta, running_mean, running_var)
    out = jax.block_until_ready(out)
    assert out.shape == (B, Cout, H, W)

    ref = _reference(x, weight, gamma, beta, running_mean, running_var)
    out_f32 = out.astype(jnp.float32)
    max_err = jnp.max(jnp.abs(out_f32 - ref))
    assert jnp.allclose(out_f32, ref, atol=atol, rtol=rtol), (
        f"mismatch (B={B},Cin={Cin},Cout={Cout},H={H},W={W}): max|err|={max_err}")


if __name__ == "__main__":
    key = jax.random.PRNGKey(0)
    k1, k2 = jax.random.split(key, 2)

    # Small-Cin (joint-packed GEMM) path — the shapes implied by the module's test use.
    _run_case(k1, B=2, Cin=4, Cout=8, H=16, W=16)

    # Large-Cin (per-tap split-K) path, also exercising the TC=256 out-channel tile.
    _run_case(k2, B=1, Cin=128, Cout=256, H=8, W=8)

    print("KERNEL_OK")
</pallas_src>

<mosaic_0001>
module attributes {stable_mosaic.version = 11 : i64} {
  func.func @_gemm_kernel(%arg0: i32, %arg1: i32, %arg2: i32, %arg3: memref<1x256x128xbf16, #tpu.memory_space<vmem>>, %arg4: memref<128x128xbf16, #tpu.memory_space<vmem>>, %arg5: memref<1x128xf32, #tpu.memory_space<vmem>>, %arg6: memref<1x128xf32, #tpu.memory_space<vmem>>, %arg7: memref<1x256x128xbf16, #tpu.memory_space<vmem>>) attributes {dimension_semantics = [#tpu.dimension_semantics<parallel>, #tpu.dimension_semantics<parallel>, #tpu.dimension_semantics<parallel>], iteration_bounds = array<i64: 2, 1, 1>, scalar_prefetch = 0 : i64, scratch_operands = 0 : i64, tpu.core_type = #tpu.core_type<tc>, window_params = [{transform_indices = @transform_0, window_bounds = array<i64: 1, 256, 128>}, {transform_indices = @transform_1, window_bounds = array<i64: 128, 128>}, {transform_indices = @transform_2, window_bounds = array<i64: 1, 128>}, {transform_indices = @transform_3, window_bounds = array<i64: 1, 128>}, {transform_indices = @transform_4, window_bounds = array<i64: 1, 256, 128>}]} {
    %c0 = arith.constant 0 : index
    %c0_0 = arith.constant 0 : index
    %c0_1 = arith.constant 0 : index
    %0 = vector.load %arg3[%c0, %c0_0, %c0_1] : memref<1x256x128xbf16, #tpu.memory_space<vmem>>, vector<1x256x128xbf16>
    %1 = vector.shape_cast %0 : vector<1x256x128xbf16> to vector<256x128xbf16>
    %c0_2 = arith.constant 0 : index
    %c0_3 = arith.constant 0 : index
    %2 = vector.load %arg4[%c0_2, %c0_3] : memref<128x128xbf16, #tpu.memory_space<vmem>>, vector<128x128xbf16>
    %cst = arith.constant dense<0.000000e+00> : vector<256x128xf32>
    %3 = tpu.matmul %1, %2, %cst {dimension_numbers = #tpu.dot_dimension_numbers<[1], [0], [0], [1], [0, 0, 1, 1], [], []>} : vector<256x128xbf16>, vector<128x128xbf16>, vector<256x128xf32> -> vector<256x128xf32>
    %c0_4 = arith.constant 0 : index
    %c0_5 = arith.constant 0 : index
    %4 = vector.load %arg5[%c0_4, %c0_5] : memref<1x128xf32, #tpu.memory_space<vmem>>, vector<1x128xf32>
    %c0_6 = arith.constant 0 : index
    %c0_7 = arith.constant 0 : index
    %5 = vector.load %arg6[%c0_6, %c0_7] : memref<1x128xf32, #tpu.memory_space<vmem>>, vector<1x128xf32>
    %6 = vector.broadcast %4 : vector<1x128xf32> to vector<256x128xf32>
    %7 = arith.mulf %3, %6 : vector<256x128xf32>
    %8 = vector.broadcast %5 : vector<1x128xf32> to vector<256x128xf32>
    %9 = arith.addf %7, %8 : vector<256x128xf32>
    %cst_8 = arith.constant 5.000000e-01 : f32
    %10 = vector.broadcast %cst_8 : f32 to vector<256x128xf32>
    %11 = arith.mulf %9, %10 : vector<256x128xf32>
    %12 = math.tanh %11 : vector<256x128xf32>
    %cst_9 = arith.constant 5.000000e-01 : f32
    %13 = vector.broadcast %cst_9 : f32 to vector<256x128xf32>
    %14 = arith.mulf %12, %13 : vector<256x128xf32>
    %cst_10 = arith.constant 5.000000e-01 : f32
    %15 = vector.broadcast %cst_10 : f32 to vector<256x128xf32>
    %16 = arith.addf %14, %15 : vector<256x128xf32>
    %17 = arith.mulf %9, %16 : vector<256x128xf32>
    %18 = arith.truncf %17 : vector<256x128xf32> to vector<256x128xbf16>
    %c0_11 = arith.constant 0 : index
    %c0_12 = arith.constant 0 : index
    %c0_13 = arith.constant 0 : index
    %19 = vector.load %arg7[%c0_11, %c0_12, %c0_13] : memref<1x256x128xbf16, #tpu.memory_space<vmem>>, vector<1x256x128xbf16>
    %20 = vector.shape_cast %19 : vector<1x256x128xbf16> to vector<256x128xbf16>
    %21 = vector.shape_cast %18 : vector<256x128xbf16> to vector<1x256x128xbf16>
    tpu.vector_store %arg7[%c0_11, %c0_12, %c0_13], %21 {strides = array<i32>} : memref<1x256x128xbf16, #tpu.memory_space<vmem>>, vector<1x256x128xbf16>,
    return
  }
  func.func @transform_0(%arg0: i32, %arg1: i32, %arg2: i32) -> (i32, i32, i32) {
    %c0_i32 = arith.constant 0 : i32
    %c0_i32_0 = arith.constant 0 : i32
    return %arg0, %arg1, %c0_i32 : i32, i32, i32
  }
  func.func @transform_1(%arg0: i32, %arg1: i32, %arg2: i32) -> (i32, i32) {
    %c0_i32 = arith.constant 0 : i32
    %c0_i32_0 = arith.constant 0 : i32
    return %c0_i32, %arg2 : i32, i32
  }
  func.func @transform_2(%arg0: i32, %arg1: i32, %arg2: i32) -> (i32, i32) {
    %c0_i32 = arith.constant 0 : i32
    %c0_i32_0 = arith.constant 0 : i32
    return %c0_i32, %arg2 : i32, i32
  }
  func.func @transform_3(%arg0: i32, %arg1: i32, %arg2: i32) -> (i32, i32) {
    %c0_i32 = arith.constant 0 : i32
    %c0_i32_0 = arith.constant 0 : i32
    return %c0_i32, %arg2 : i32, i32
  }
  func.func @transform_4(%arg0: i32, %arg1: i32, %arg2: i32) -> (i32, i32, i32) {
    %c0_i32 = arith.constant 0 : i32
    return %arg0, %arg1, %arg2 : i32, i32, i32
  }
}

</mosaic_0001>

<llo_original>
// kernel: tpu_custom_call.1
$region0: #{tpu_custom_call.1}
  #allocation0 [shape = 'u32[]', space=smem, size = 0x4, offset = 0x4, fixed_abs, tag = 'smem constant byte address 0x4 - core index']
  #allocation1 [shape = 'u32[72,128]{1,0:T(1,128)}', space=vmem, size = 0x9000, scoped, tag = 'internal scratch']
  %s0 = inlined_call_operand.hbm [shape: bf16[2,256,128], index: 0, kind: input, shape index: {}]
  %s1 = inlined_call_operand.hbm [shape: bf16[128,128], index: 1, kind: input, shape index: {}]
  %s2 = inlined_call_operand.vmem [shape: f32[1,128], index: 2, kind: input, shape index: {}]
  %s3 = inlined_call_operand.vmem [shape: f32[1,128], index: 3, kind: input, shape index: {}]
  %s4 = inlined_call_operand.hbm [shape: bf16[2,256,128], index: 4, kind: output, shape index: {}]
  %s5 = sld [smem:[#allocation0]]
  $region57: #{tpu_custom_call.1} parent=0
    _
  %s7 = ssub.s32 1, %s5
  %s8 = scalar_select 0, %s7, %s5
  $region1: #{tpu_custom_call.1} parent=0
    #allocation2 [shape = 'u8[131072]{0}', space=vmem, size = 0x20000, scoped, tag = 'input window, operand 0']
    #allocation3 [shape = 's32[2]{0}', space=sflag, size = 0x8, scoped, tag = 'scoped memory for tpu_custom_call.1']
    #allocation4 [shape = 's32[2]{0}', space=sflag, size = 0x8, scoped, tag = 'scoped memory for tpu_custom_call.1']
    #allocation5 [shape = 'u8[32768]{0}', space=vmem, size = 0x8000, scoped, tag = 'input window, operand 1, single buffered']
    #allocation6 [shape = 's32[1]{0}', space=sflag, size = 0x4, scoped, tag = 'scoped memory for tpu_custom_call.1']
    #allocation7 [shape = 'u8[131072]{0}', space=vmem, size = 0x20000, scoped, tag = 'output window, operand 0']
    %9 = vsyncpa [#allocation3], 0
    %s10 = scalar_lea.sflag [#allocation3], 1
    %11 = vsyncpa %s10, 0
    %12 = vsyncpa [#allocation6], 0
    %13 = vsyncpa [#allocation4], 0
    %s14 = scalar_lea.sflag [#allocation4], 1
    %15 = vsyncpa %s14, 0
    loop: start=0, step=1, limit=4
    $region2: #{tpu_custom_call.1} parent=1 // loop_pre_header
      _
    $region3: #{tpu_custom_call.1} parent=1 // loop_header
      %s17 = sphi 0, %s21
      %p18 = scmp.ge.s32.totalorder %s17, 4
      %s24 = sphi 0, %s43
      %s25 = sphi 0, %s39
      %s26 = sphi 0, %s35
      %s27 = sphi 0, %s24
      %s28 = sphi 0, %s25
      %s29 = sphi 0, %s26
      %s30 = sphi 0, %s27
      %s31 = sphi 0, %s28
      %s32 = sphi 0, %s29
      %s48 = sphi 0, %s50
      %s51 = sphi 0, %s48
      %s52 = sphi 0, %s51
      %s68 = sphi 0, %s52
      %s74 = sphi 0, %s76
      %s77 = sphi 0, %s74
      %s78 = sphi 0, %s77
      %s94 = sphi 0, %s78
      %s100 = sphi 0, %s102
      %s103 = sphi 0, %s100
      %s104 = sphi 0, %s103
      %s120 = sphi 0, %s104
      %s126 = sphi 0, %s128
      %s129 = sphi 0, %s126
      %s130 = sphi 0, %s129
      %s146 = sphi 0, %s130
      %s156 = sphi 0, %s158
      %s159 = sphi 0, %s156
      %s160 = sphi 0, %s159
      %s176 = sphi 0, %s160
    $region4: #{tpu_custom_call.1} parent=1 // loop_header_branch
      %20 = sbr.rel (%p18) target = $region8
    $region5: #{tpu_custom_call.1} parent=1 // loop_body
      %s22 = ssub.s32 %s17, 1
      %s23 = ssub.s32 %s17, 2
      %s33 = sadd.s32 1, %s26
      %p34 = scmp.ge.s32.totalorder %s33, 1
      %s35 = scalar_select %p34, 0, %s33
      %s36 = sadd.s32 1, %s25
      %s37 = scalar_select %p34, %s36, %s25
      %p38 = scmp.ge.s32.totalorder %s37, 1
      %s39 = scalar_select %p38, 0, %s37
      %s40 = sadd.s32 1, %s24
      %s41 = scalar_select %p38, %s40, %s24
      %p42 = scmp.ge.s32.totalorder %s41, 2
      %s43 = scalar_select %p42, 0, %s41
      %s44 = ssub.s32 %s24, %s43
      %s45 = ssub.s32 %s25, %s39
      %s46 = sor.u32 %s44, %s45
      %p47 = scmp.eq.s32.totalorder %s46, 0
      %s49 = sadd.s32 %s48, 1
      %s50 = scalar_select %p47, %s48, %s49
      %p53 = pneg %p47
      %p54 = scmp.eq.s32.totalorder %s17, 1
      %p55 = por %p53, %p54
      %p56 = scmp.ne.s32.totalorder %s48, %s51
      %p57 = scmp.eq.s32.totalorder %s17, 0
      %p58 = por %p56, %p57
      %p59 = scmp.ne.s32.totalorder %s48, %s51
      %p60 = scmp.eq.s32.totalorder %s22, 1
      %p61 = por %p59, %p60
      %p62 = scmp.ne.s32.totalorder %s51, %s52
      %p63 = scmp.eq.s32.totalorder %s22, 0
      %p64 = por %p62, %p63
      %p65 = scmp.ne.s32.totalorder %s51, %s52
      %p66 = scmp.eq.s32.totalorder %s23, 1
      %p67 = por %p65, %p66
      %p69 = scmp.ne.s32.totalorder %s52, %s68
      %p70 = scmp.eq.s32.totalorder %s23, 0
      %p71 = por %p69, %p70
      %s72 = ssub.s32 %s26, %s35
      %p73 = scmp.eq.s32.totalorder %s72, 0
      %s75 = sadd.s32 %s74, 1
      %s76 = scalar_select %p73, %s74, %s75
      %p79 = pneg %p73
      %p80 = scmp.eq.s32.totalorder %s17, 1
      %p81 = por %p79, %p80
      %p82 = scmp.ne.s32.totalorder %s74, %s77
      %p83 = scmp.eq.s32.totalorder %s17, 0
      %p84 = por %p82, %p83
      %p85 = scmp.ne.s32.totalorder %s74, %s77
      %p86 = scmp.eq.s32.totalorder %s22, 1
      %p87 = por %p85, %p86
      %p88 = scmp.ne.s32.totalorder %s77, %s78
      %p89 = scmp.eq.s32.totalorder %s22, 0
      %p90 = por %p88, %p89
      %p91 = scmp.ne.s32.totalorder %s77, %s78
      %p92 = scmp.eq.s32.totalorder %s23, 1
      %p93 = por %p91, %p92
      %p95 = scmp.ne.s32.totalorder %s78, %s94
      %p96 = scmp.eq.s32.totalorder %s23, 0
      %p97 = por %p95, %p96
      %s98 = ssub.s32 %s26, %s35
      %p99 = scmp.eq.s32.totalorder %s98, 0
      %s101 = sadd.s32 %s100, 1
      %s102 = scalar_select %p99, %s100, %s101
      %p105 = pneg %p99
      %p106 = scmp.eq.s32.totalorder %s17, 1
      %p107 = por %p105, %p106
      %p108 = scmp.ne.s32.totalorder %s100, %s103
      %p109 = scmp.eq.s32.totalorder %s17, 0
      %p110 = por %p108, %p109
      %p111 = scmp.ne.s32.totalorder %s100, %s103
      %p112 = scmp.eq.s32.totalorder %s22, 1
      %p113 = por %p111, %p112
      %p114 = scmp.ne.s32.totalorder %s103, %s104
      %p115 = scmp.eq.s32.totalorder %s22, 0
      %p116 = por %p114, %p115
      %p117 = scmp.ne.s32.totalorder %s103, %s104
      %p118 = scmp.eq.s32.totalorder %s23, 1
      %p119 = por %p117, %p118
      %p121 = scmp.ne.s32.totalorder %s104, %s120
      %p122 = scmp.eq.s32.totalorder %s23, 0
      %p123 = por %p121, %p122
      %s124 = ssub.s32 %s26, %s35
      %p125 = scmp.eq.s32.totalorder %s124, 0
      %s127 = sadd.s32 %s126, 1
      %s128 = scalar_select %p125, %s126, %s127
      %p131 = pneg %p125
      %p132 = scmp.eq.s32.totalorder %s17, 1
      %p133 = por %p131, %p132
      %p134 = scmp.ne.s32.totalorder %s126, %s129
      %p135 = scmp.eq.s32.totalorder %s17, 0
      %p136 = por %p134, %p135
      %p137 = scmp.ne.s32.totalorder %s126, %s129
      %p138 = scmp.eq.s32.totalorder %s22, 1
      %p139 = por %p137, %p138
      %p140 = scmp.ne.s32.totalorder %s129, %s130
      %p141 = scmp.eq.s32.totalorder %s22, 0
      %p142 = por %p140, %p141
      %p143 = scmp.ne.s32.totalorder %s129, %s130
      %p144 = scmp.eq.s32.totalorder %s23, 1
      %p145 = por %p143, %p144
      %p147 = scmp.ne.s32.totalorder %s130, %s146
      %p148 = scmp.eq.s32.totalorder %s23, 0
      %p149 = por %p147, %p148
      %s150 = ssub.s32 %s24, %s43
      %s151 = ssub.s32 %s25, %s39
      %s152 = sor.u32 %s150, %s151
      %s153 = ssub.s32 %s26, %s35
      %s154 = sor.u32 %s152, %s153
      %p155 = scmp.eq.s32.totalorder %s154, 0
      %s157 = sadd.s32 %s156, 1
      %s158 = scalar_select %p155, %s156, %s157
      %p161 = pneg %p155
      %p162 = scmp.eq.s32.totalorder %s17, 1
      %p163 = por %p161, %p162
      %p164 = scmp.ne.s32.totalorder %s156, %s159
      %p165 = scmp.eq.s32.totalorder %s17, 0
      %p166 = por %p164, %p165
      %p167 = scmp.ne.s32.totalorder %s156, %s159
      %p168 = scmp.eq.s32.totalorder %s22, 1
      %p169 = por %p167, %p168
      %p170 = scmp.ne.s32.totalorder %s159, %s160
      %p171 = scmp.eq.s32.totalorder %s22, 0
      %p172 = por %p170, %p171
      %p173 = scmp.ne.s32.totalorder %s159, %s160
      %p174 = scmp.eq.s32.totalorder %s23, 1
      %p175 = por %p173, %p174
      %p177 = scmp.ne.s32.totalorder %s160, %s176
      %p178 = scmp.eq.s32.totalorder %s23, 0
      %p179 = por %p177, %p178
      %p180 = scmp.le.s32.totalorder 1, %s17
      %p181 = scmp.lt.s32.totalorder %s17, 3
      %p182 = pnand %p180, %p181
      %p183 = pneg %p182
      // Predicated region
      $region9: #{tpu_custom_call.1} parent=5 // pred_check
        _
      $region10: #{tpu_custom_call.1} parent=5 // pred_check_branch
        %185 = sbr.rel (%p182) target = $region12
      $region11: #{tpu_custom_call.1} parent=5 // pred_region
        %s186 = ssub.s32 %s17, 1
        // Predicated region
        $region13: #{tpu_custom_call.1} parent=11 // pred_check
          %p187 = pneg %p90
        $region14: #{tpu_custom_call.1} parent=11 // pred_check_branch
          %189 = sbr.rel (%p187) target = $region16
        $region15: #{tpu_custom_call.1} parent=11 // pred_region
          %191 = vsyncadd [#allocation6], 0
          %s192 = smul.addr %s29, 4
          %s193 = scalar_lea.hbm %s1, %s192
          %s194 = sshll.u32 %s193, 4
          %s195 = int_to_ptr.hbm [resolvable:$true] %s194
          %s196 = sshll.u32 [#allocation5], 4
          %s197 = int_to_ptr.vmem [resolvable:$true] %s196
          %202 = dma.hbm_to_vmem [thread:$0]  %s195, 1024, %s197, [#allocation6], 64, 64, 4
        $region16: #{tpu_custom_call.1} parent=11 // pred_fallthru
          _
        // Predicated region
        $region17: #{tpu_custom_call.1} parent=11 // pred_check
          %p203 = pneg %p116
        $region18: #{tpu_custom_call.1} parent=11 // pred_check_branch
          %205 = sbr.rel (%p203) target = $region20
        $region19: #{tpu_custom_call.1} parent=11 // pred_region
          %p206 = scmp.lt.s32.totalorder %s29, 0
          %s207 = scalar_select %p206, %s29, 0
          %s208 = scalar_lea.vmem %s2, %s207
        $region20: #{tpu_custom_call.1} parent=11 // pred_fallthru
          _
        // Predicated region
        $region21: #{tpu_custom_call.1} parent=11 // pred_check
          %p209 = pneg %p142
        $region22: #{tpu_custom_call.1} parent=11 // pred_check_branch
          %211 = sbr.rel (%p209) target = $region24
        $region23: #{tpu_custom_call.1} parent=11 // pred_region
          %p212 = scmp.lt.s32.totalorder %s29, 0
          %s213 = scalar_select %p212, %s29, 0
          %s214 = scalar_lea.vmem %s3, %s213
        $region24: #{tpu_custom_call.1} parent=11 // pred_fallthru
          _
      $region12: #{tpu_custom_call.1} parent=5 // pred_fallthru
        _
      %p215 = scmp.lt.s32.totalorder %s17, 2
      // Predicated region
      $region25: #{tpu_custom_call.1} parent=5 // pred_check
        %p216 = pneg %p215
      $region26: #{tpu_custom_call.1} parent=5 // pred_check_branch
        %218 = sbr.rel (%p216) target = $region28
      $region27: #{tpu_custom_call.1} parent=5 // pred_region
        // Predicated region
        $region29: #{tpu_custom_call.1} parent=27 // pred_check
          %p219 = pneg %p58
        $region30: #{tpu_custom_call.1} parent=27 // pred_check_branch
          %221 = sbr.rel (%p219) target = $region32
        $region31: #{tpu_custom_call.1} parent=27 // pred_region
          %s222 = sand.u32 %s48, 1
          %s223 = scalar_lea.sflag [#allocation3], %s222
          %s224 = sand.u32 %s48, 1
          %s225 = smul.addr %s224, 128
          %s226 = scalar_lea.vmem [#allocation2], %s225
          %s227 = smul.u32 32, %s25
          %229 = vsyncadd %s223, 0
          %s230 = smul.addr %s24, 32
          %s231 = sadd.s32 %s227, %s230
          %s232 = smul.addr %s231, 4
          %s233 = scalar_lea.hbm %s0, %s232
          %s234 = sshll.u32 %s233, 4
          %s235 = int_to_ptr.hbm [resolvable:$true] %s234
          %s236 = sshll.u32 %s226, 4
          %s237 = int_to_ptr.vmem [resolvable:$true] %s236
          %242 = dma.hbm_to_vmem [thread:$0]  %s235, 2048, %s237, %s223, 64, 64, 4
        $region32: #{tpu_custom_call.1} parent=27 // pred_fallthru
          _
      $region28: #{tpu_custom_call.1} parent=5 // pred_fallthru
        _
      %p243 = scmp.le.s32.totalorder 1, %s17
      %p244 = scmp.lt.s32.totalorder %s17, 3
      %p245 = pnand %p243, %p244
      %p246 = pneg %p245
      // Predicated region
      $region33: #{tpu_custom_call.1} parent=5 // pred_check
        _
      $region34: #{tpu_custom_call.1} parent=5 // pred_check_branch
        %248 = sbr.rel (%p245) target = $region36
      $region35: #{tpu_custom_call.1} parent=5 // pred_region
        %s249 = ssub.s32 %s17, 1
        %s250 = sand.u32 %s51, 1
        %s251 = scalar_lea.sflag [#allocation3], %s250
        %s252 = sand.u32 %s51, 1
        %s253 = smul.addr %s252, 128
        %s254 = scalar_lea.vmem [#allocation2], %s253
        // Predicated region
        $region37: #{tpu_custom_call.1} parent=35 // pred_check
          %p255 = pneg %p64
        $region38: #{tpu_custom_call.1} parent=35 // pred_check_branch
          %257 = sbr.rel (%p255) target = $region40
        $region39: #{tpu_custom_call.1} parent=35 // pred_region
          %259 = dma.done %s251, 2048
        $region40: #{tpu_custom_call.1} parent=35 // pred_fallthru
          _
        // Predicated region
        $region41: #{tpu_custom_call.1} parent=35 // pred_check
          %p260 = pneg %p90
        $region42: #{tpu_custom_call.1} parent=35 // pred_check_branch
          %262 = sbr.rel (%p260) target = $region44
        $region43: #{tpu_custom_call.1} parent=35 // pred_region
          %264 = dma.done [#allocation6], 1024
        $region44: #{tpu_custom_call.1} parent=35 // pred_fallthru
          _
        %s265 = sand.u32 %s51, 1
        %s266 = scalar_lea.sflag [#allocation3], %s265
        %s267 = sand.u32 %s51, 1
        %s268 = smul.addr %s267, 128
        %s269 = scalar_lea.vmem [#allocation2], %s268
        %p270 = pneg %p64
        %p271 = pneg %p61
        %p272 = pneg %p90
        %p273 = pneg %p87
        %p274 = scmp.lt.s32.totalorder %s29, 0
        %s275 = scalar_select %p274, %s29, 0
        %s276 = scalar_lea.vmem %s2, %s275
        %p277 = pneg %p116
        %p278 = pneg %p113
        %p279 = scmp.lt.s32.totalorder %s29, 0
        %s280 = scalar_select %p279, %s29, 0
        %s281 = scalar_lea.vmem %s3, %s280
        %p282 = pneg %p142
        %p283 = pneg %p139
        %p284 = pneg %p172
        %p285 = pneg %p169
        %s286 = sand.u32 %s159, 1
        %s287 = scalar_lea.sflag [#allocation4], %s286
        %s288 = sand.u32 %s159, 1
        %s289 = smul.addr %s288, 128
        %s290 = scalar_lea.vmem [#allocation7], %s289
        %s291 = smul.u32 32, %s28
        %p292 = scmp.lt.s32.totalorder %s29, 0
        %s293 = scalar_select %p292, %s29, 0
        %s294 = scalar_lea.vmem %s2, %s293
        %p295 = scmp.lt.s32.totalorder %s29, 0
        %s296 = scalar_select %p295, %s29, 0
        %s297 = scalar_lea.vmem %s3, %s296
        %s298 = smul.u32 32, %s28
        %v299 = vld [vmem:[%s254] sm:$0xf]
        %v300 = vld [vmem:[%s254 + $0x4] sm:$0xf]
        %v301 = vld [vmem:[%s254 + $0x8] sm:$0xf]
        %v302 = vld [vmem:[%s254 + $0xc] sm:$0xf]
        %v303 = vld [vmem:[%s254 + $0x10] sm:$0xf]
        %v304 = vld [vmem:[%s254 + $0x14] sm:$0xf]
        %v305 = vld [vmem:[%s254 + $0x18] sm:$0xf]
        %v306 = vld [vmem:[%s254 + $0x1c] sm:$0xf]
        %v307 = vld [vmem:[%s254 + $0x20] sm:$0xf]
        %v308 = vld [vmem:[%s254 + $0x24] sm:$0xf]
        %v309 = vld [vmem:[%s254 + $0x28] sm:$0xf]
        %v310 = vld [vmem:[%s254 + $0x2c] sm:$0xf]
        %v311 = vld [vmem:[%s254 + $0x30] sm:$0xf]
        %v312 = vld [vmem:[%s254 + $0x34] sm:$0xf]
        %v313 = vld [vmem:[%s254 + $0x38] sm:$0xf]
        %v314 = vld [vmem:[%s254 + $0x3c] sm:$0xf]
        %v315 = vld [vmem:[%s254 + $0x40] sm:$0xf]
        %v316 = vld [vmem:[%s254 + $0x44] sm:$0xf]
        %v317 = vld [vmem:[%s254 + $0x48] sm:$0xf]
        %v318 = vld [vmem:[%s254 + $0x4c] sm:$0xf]
        %v319 = vld [vmem:[%s254 + $0x50] sm:$0xf]
        %v320 = vld [vmem:[%s254 + $0x54] sm:$0xf]
        %v321 = vld [vmem:[%s254 + $0x58] sm:$0xf]
        %v322 = vld [vmem:[%s254 + $0x5c] sm:$0xf]
        %v323 = vld [vmem:[%s254 + $0x60] sm:$0xf]
        %v324 = vld [vmem:[%s254 + $0x64] sm:$0xf]
        %v325 = vld [vmem:[%s254 + $0x68] sm:$0xf]
        %v326 = vld [vmem:[%s254 + $0x6c] sm:$0xf]
        %v327 = vld [vmem:[%s254 + $0x70] sm:$0xf]
        %v328 = vld [vmem:[%s254 + $0x74] sm:$0xf]
        %v329 = vld [vmem:[%s254 + $0x78] sm:$0xf]
        %v330 = vld [vmem:[%s254 + $0x7c] sm:$0xf]
        %v331 = vld [vmem:[#allocation5] sm:$0xf]
        %v332 = vld [vmem:[#allocation5 + $0x4] sm:$0xf]
        %v333 = vld [vmem:[#allocation5 + $0x8] sm:$0xf]
        %v334 = vld [vmem:[#allocation5 + $0xc] sm:$0xf]
        %v335 = vld [vmem:[#allocation5 + $0x10] sm:$0xf]
        %v336 = vld [vmem:[#allocation5 + $0x14] sm:$0xf]
        %v337 = vld [vmem:[#allocation5 + $0x18] sm:$0xf]
        %v338 = vld [vmem:[#allocation5 + $0x1c] sm:$0xf]
        %v339 = vld [vmem:[#allocation5 + $0x20] sm:$0xf]
        %v340 = vld [vmem:[#allocation5 + $0x24] sm:$0xf]
        %v341 = vld [vmem:[#allocation5 + $0x28] sm:$0xf]
        %v342 = vld [vmem:[#allocation5 + $0x2c] sm:$0xf]
        %v343 = vld [vmem:[#allocation5 + $0x30] sm:$0xf]
        %v344 = vld [vmem:[#allocation5 + $0x34] sm:$0xf]
        %v345 = vld [vmem:[#allocation5 + $0x38] sm:$0xf]
        %v346 = vld [vmem:[#allocation5 + $0x3c] sm:$0xf]
        %v379 = vunpack.c.l.b16 %v299
        %v380 = vunpack.c.l.b16 %v300
        %v381 = vunpack.c.l.b16 %v301
        %v382 = vunpack.c.l.b16 %v302
        %v383 = vunpack.c.l.b16 %v303
        %v384 = vunpack.c.l.b16 %v304
        %v385 = vunpack.c.l.b16 %v305
        %v386 = vunpack.c.l.b16 %v306
        %v387 = vunpack.c.l.b16 %v307
        %v388 = vunpack.c.l.b16 %v308
        %v389 = vunpack.c.l.b16 %v309
        %v390 = vunpack.c.l.b16 %v310
        %v391 = vunpack.c.l.b16 %v311
        %v392 = vunpack.c.l.b16 %v312
        %v393 = vunpack.c.l.b16 %v313
        %v394 = vunpack.c.l.b16 %v314
        %v395 = vunpack.c.l.b16 %v315
        %v396 = vunpack.c.l.b16 %v316
        %v397 = vunpack.c.l.b16 %v317
        %v398 = vunpack.c.l.b16 %v318
        %v399 = vunpack.c.l.b16 %v319
        %v400 = vunpack.c.l.b16 %v320
        %v401 = vunpack.c.l.b16 %v321
        %v402 = vunpack.c.l.b16 %v322
        %v403 = vunpack.c.l.b16 %v323
        %v404 = vunpack.c.l.b16 %v324
        %v405 = vunpack.c.l.b16 %v325
        %v406 = vunpack.c.l.b16 %v326
        %v407 = vunpack.c.l.b16 %v327
        %v408 = vunpack.c.l.b16 %v328
        %v409 = vunpack.c.l.b16 %v329
        %v410 = vunpack.c.l.b16 %v330
        %v411 = vpack.c.b16 %v380, %v379
        %v412 = vpack.c.b16 %v382, %v381
        %v413 = vpack.c.b16 %v384, %v383
        %v414 = vpack.c.b16 %v386, %v385
        %v415 = vpack.c.b16 %v388, %v387
        %v416 = vpack.c.b16 %v390, %v389
        %v417 = vpack.c.b16 %v392, %v391
        %v418 = vpack.c.b16 %v394, %v393
        %v419 = vpack.c.b16 %v396, %v395
        %v420 = vpack.c.b16 %v398, %v397
        %v421 = vpack.c.b16 %v400, %v399
        %v422 = vpack.c.b16 %v402, %v401
        %v423 = vpack.c.b16 %v404, %v403
        %v424 = vpack.c.b16 %v406, %v405
        %v425 = vpack.c.b16 %v408, %v407
        %v426 = vpack.c.b16 %v410, %v409
        %v459 = vunpack.c.l.b16 %v331
        %v460 = vunpack.c.l.b16 %v332
        %v461 = vunpack.c.l.b16 %v333
        %v462 = vunpack.c.l.b16 %v334
        %v463 = vunpack.c.l.b16 %v335
        %v464 = vunpack.c.l.b16 %v336
        %v465 = vunpack.c.l.b16 %v337
        %v466 = vunpack.c.l.b16 %v338
        %v467 = vunpack.c.l.b16 %v339
        %v468 = vunpack.c.l.b16 %v340
        %v469 = vunpack.c.l.b16 %v341
        %v470 = vunpack.c.l.b16 %v342
        %v471 = vunpack.c.l.b16 %v343
        %v472 = vunpack.c.l.b16 %v344
        %v473 = vunpack.c.l.b16 %v345
        %v474 = vunpack.c.l.b16 %v346
        %v475 = vpack.c.b16 %v460, %v459
        %v476 = vpack.c.b16 %v462, %v461
        %v477 = vpack.c.b16 %v464, %v463
        %v478 = vpack.c.b16 %v466, %v465
        %v479 = vpack.c.b16 %v468, %v467
        %v480 = vpack.c.b16 %v470, %v469
        %v481 = vpack.c.b16 %v472, %v471
        %v482 = vpack.c.b16 %v474, %v473
        %491 = vmatpush.bf16.msra.mxu0 %v482
        %492 = vmatpush.bf16.msra.mxu0 %v481
        %493 = vmatpush.bf16.msra.mxu0 %v480
        %494 = vmatpush.bf16.msra.mxu0 %v479
        %495 = vmatpush.bf16.msra.mxu0 %v478
        %496 = vmatpush.bf16.msra.mxu0 %v477
        %497 = vmatpush.bf16.msra.mxu0 %v476
        %498 = vmatpush.bf16.msra.mxu0 %v475
        %499 = vmatmul.bf16.gmra.mxu0 %v411
        %v500 = vpop.f32.mrf.mxu0
        %v501 = vadd.f32 0.0, %v500
        %v502 = vpop.f32.mrf.mxu0
        %v503 = vadd.f32 0.0, %v502
        %504 = vmatmul.bf16.gmra.mxu0 %v412
        %v505 = vpop.f32.mrf.mxu0
        %v506 = vadd.f32 0.0, %v505
        %v507 = vpop.f32.mrf.mxu0
        %v508 = vadd.f32 0.0, %v507
        %509 = vmatmul.bf16.gmra.mxu0 %v413
        %v510 = vpop.f32.mrf.mxu0
        %v511 = vadd.f32 0.0, %v510
        %v512 = vpop.f32.mrf.mxu0
        %v513 = vadd.f32 0.0, %v512
        %514 = vmatmul.bf16.gmra.mxu0 %v414
        %v515 = vpop.f32.mrf.mxu0
        %v516 = vadd.f32 0.0, %v515
        %v517 = vpop.f32.mrf.mxu0
        %v518 = vadd.f32 0.0, %v517
        %519 = vmatmul.bf16.gmra.mxu0 %v415
        %v520 = vpop.f32.mrf.mxu0
        %v521 = vadd.f32 0.0, %v520
        %v522 = vpop.f32.mrf.mxu0
        %v523 = vadd.f32 0.0, %v522
        %524 = vmatmul.bf16.gmra.mxu0 %v416
        %v525 = vpop.f32.mrf.mxu0
        %v526 = vadd.f32 0.0, %v525
        %v527 = vpop.f32.mrf.mxu0
        %v528 = vadd.f32 0.0, %v527
        %529 = vmatmul.bf16.gmra.mxu0 %v417
        %v530 = vpop.f32.mrf.mxu0
        %v531 = vadd.f32 0.0, %v530
        %v532 = vpop.f32.mrf.mxu0
        %v533 = vadd.f32 0.0, %v532
        %534 = vmatmul.bf16.gmra.mxu0 %v418
        %v535 = vpop.f32.mrf.mxu0
        %v536 = vadd.f32 0.0, %v535
        %v537 = vpop.f32.mrf.mxu0
        %v538 = vadd.f32 0.0, %v537
        %539 = vmatmul.bf16.gmra.mxu0 %v419
        %v540 = vpop.f32.mrf.mxu0
        %v541 = vadd.f32 0.0, %v540
        %v542 = vpop.f32.mrf.mxu0
        %v543 = vadd.f32 0.0, %v542
        %544 = vmatmul.bf16.gmra.mxu0 %v420
        %v545 = vpop.f32.mrf.mxu0
        %v546 = vadd.f32 0.0, %v545
        %v547 = vpop.f32.mrf.mxu0
        %v548 = vadd.f32 0.0, %v547
        %549 = vmatmul.bf16.gmra.mxu0 %v421
        %v550 = vpop.f32.mrf.mxu0
        %v551 = vadd.f32 0.0, %v550
        %v552 = vpop.f32.mrf.mxu0
        %v553 = vadd.f32 0.0, %v552
        %554 = vmatmul.bf16.gmra.mxu0 %v422
        %v555 = vpop.f32.mrf.mxu0
        %v556 = vadd.f32 0.0, %v555
        %v557 = vpop.f32.mrf.mxu0
        %v558 = vadd.f32 0.0, %v557
        %559 = vmatmul.bf16.gmra.mxu0 %v423
        %v560 = vpop.f32.mrf.mxu0
        %v561 = vadd.f32 0.0, %v560
        %v562 = vpop.f32.mrf.mxu0
        %v563 = vadd.f32 0.0, %v562
        %564 = vmatmul.bf16.gmra.mxu0 %v424
        %v565 = vpop.f32.mrf.mxu0
        %v566 = vadd.f32 0.0, %v565
        %v567 = vpop.f32.mrf.mxu0
        %v568 = vadd.f32 0.0, %v567
        %569 = vmatmul.bf16.gmra.mxu0 %v425
        %v570 = vpop.f32.mrf.mxu0
        %v571 = vadd.f32 0.0, %v570
        %v572 = vpop.f32.mrf.mxu0
        %v573 = vadd.f32 0.0, %v572
        %574 = vmatmul.bf16.gmra.mxu0 %v426
        %v575 = vpop.f32.mrf.mxu0
        %v576 = vadd.f32 0.0, %v575
        %v577 = vpop.f32.mrf.mxu0
        %v578 = vadd.f32 0.0, %v577
        %579 = vdwg.mxu0
        %v580 = vld [vmem:[%s294] sm:$0x1]
        %v581 = vld [vmem:[%s297] sm:$0x1]
        %v583 = vperm.slane %v580, 0
        %v585 = vmul.f32 %v501, %v583
        %v586 = vmul.f32 %v503, %v583
        %v587 = vmul.f32 %v506, %v583
        %v588 = vmul.f32 %v508, %v583
        %v589 = vmul.f32 %v511, %v583
        %v590 = vmul.f32 %v513, %v583
        %v591 = vmul.f32 %v516, %v583
        %v592 = vmul.f32 %v518, %v583
        %v593 = vmul.f32 %v521, %v583
        %v594 = vmul.f32 %v523, %v583
        %v595 = vmul.f32 %v526, %v583
        %v596 = vmul.f32 %v528, %v583
        %v597 = vmul.f32 %v531, %v583
        %v598 = vmul.f32 %v533, %v583
        %v599 = vmul.f32 %v536, %v583
        %v600 = vmul.f32 %v538, %v583
        %v601 = vmul.f32 %v541, %v583
        %v602 = vmul.f32 %v543, %v583
        %v603 = vmul.f32 %v546, %v583
        %v604 = vmul.f32 %v548, %v583
        %v605 = vmul.f32 %v551, %v583
        %v606 = vmul.f32 %v553, %v583
        %v607 = vmul.f32 %v556, %v583
        %v608 = vmul.f32 %v558, %v583
        %v609 = vmul.f32 %v561, %v583
        %v610 = vmul.f32 %v563, %v583
        %v611 = vmul.f32 %v566, %v583
        %v612 = vmul.f32 %v568, %v583
        %v613 = vmul.f32 %v571, %v583
        %v614 = vmul.f32 %v573, %v583
        %v615 = vmul.f32 %v576, %v583
        %v616 = vmul.f32 %v578, %v583
        %v618 = vperm.slane %v581, 0
        %v620 = vadd.f32 %v585, %v618
        %v621 = vadd.f32 %v586, %v618
        %v622 = vadd.f32 %v587, %v618
        %v623 = vadd.f32 %v588, %v618
        %v624 = vadd.f32 %v589, %v618
        %v625 = vadd.f32 %v590, %v618
        %v626 = vadd.f32 %v591, %v618
        %v627 = vadd.f32 %v592, %v618
        %v628 = vadd.f32 %v593, %v618
        %v629 = vadd.f32 %v594, %v618
        %v630 = vadd.f32 %v595, %v618
        %v631 = vadd.f32 %v596, %v618
        %v632 = vadd.f32 %v597, %v618
        %v633 = vadd.f32 %v598, %v618
        %v634 = vadd.f32 %v599, %v618
        %v635 = vadd.f32 %v600, %v618
        %v636 = vadd.f32 %v601, %v618
        %v637 = vadd.f32 %v602, %v618
        %v638 = vadd.f32 %v603, %v618
        %v639 = vadd.f32 %v604, %v618
        %v640 = vadd.f32 %v605, %v618
        %v641 = vadd.f32 %v606, %v618
        %v642 = vadd.f32 %v607, %v618
        %v643 = vadd.f32 %v608, %v618
        %v644 = vadd.f32 %v609, %v618
        %v645 = vadd.f32 %v610, %v618
        %v646 = vadd.f32 %v611, %v618
        %v647 = vadd.f32 %v612, %v618
        %v648 = vadd.f32 %v613, %v618
        %v649 = vadd.f32 %v614, %v618
        %v650 = vadd.f32 %v615, %v618
        %v651 = vadd.f32 %v616, %v618
        %v652 = vmul.f32 %v620, 0.5
        %v653 = vmul.f32 %v621, 0.5
        %v654 = vmul.f32 %v622, 0.5
        %v655 = vmul.f32 %v623, 0.5
        %v656 = vmul.f32 %v624, 0.5
        %v657 = vmul.f32 %v625, 0.5
        %v658 = vmul.f32 %v626, 0.5
        %v659 = vmul.f32 %v627, 0.5
        %v660 = vmul.f32 %v628, 0.5
        %v661 = vmul.f32 %v629, 0.5
        %v662 = vmul.f32 %v630, 0.5
        %v663 = vmul.f32 %v631, 0.5
        %v664 = vmul.f32 %v632, 0.5
        %v665 = vmul.f32 %v633, 0.5
        %v666 = vmul.f32 %v634, 0.5
        %v667 = vmul.f32 %v635, 0.5
        %v668 = vmul.f32 %v636, 0.5
        %v669 = vmul.f32 %v637, 0.5
        %v670 = vmul.f32 %v638, 0.5
        %v671 = vmul.f32 %v639, 0.5
        %v672 = vmul.f32 %v640, 0.5
        %v673 = vmul.f32 %v641, 0.5
        %v674 = vmul.f32 %v642, 0.5
        %v675 = vmul.f32 %v643, 0.5
        %v676 = vmul.f32 %v644, 0.5
        %v677 = vmul.f32 %v645, 0.5
        %v678 = vmul.f32 %v646, 0.5
        %v679 = vmul.f32 %v647, 0.5
        %v680 = vmul.f32 %v648, 0.5
        %v681 = vmul.f32 %v649, 0.5
        %v682 = vmul.f32 %v650, 0.5
        %v683 = vmul.f32 %v651, 0.5
        %v684 = vtanh.pop %v652
        %v685 = vtanh.pop %v653
        %v686 = vtanh.pop %v654
        %v687 = vtanh.pop %v655
        %v688 = vtanh.pop %v656
        %v689 = vtanh.pop %v657
        %v690 = vtanh.pop %v658
        %v691 = vtanh.pop %v659
        %v692 = vtanh.pop %v660
        %v693 = vtanh.pop %v661
        %v694 = vtanh.pop %v662
        %v695 = vtanh.pop %v663
        %v696 = vtanh.pop %v664
        %v697 = vtanh.pop %v665
        %v698 = vtanh.pop %v666
        %v699 = vtanh.pop %v667
        %v700 = vtanh.pop %v668
        %v701 = vtanh.pop %v669
        %v702 = vtanh.pop %v670
        %v703 = vtanh.pop %v671
        %v704 = vtanh.pop %v672
        %v705 = vtanh.pop %v673
        %v706 = vtanh.pop %v674
        %v707 = vtanh.pop %v675
        %v708 = vtanh.pop %v676
        %v709 = vtanh.pop %v677
        %v710 = vtanh.pop %v678
        %v711 = vtanh.pop %v679
        %v712 = vtanh.pop %v680
        %v713 = vtanh.pop %v681
        %v714 = vtanh.pop %v682
        %v715 = vtanh.pop %v683
        %v716 = vmul.f32 %v684, 0.5
        %v717 = vmul.f32 %v685, 0.5
        %v718 = vmul.f32 %v686, 0.5
        %v719 = vmul.f32 %v687, 0.5
        %v720 = vmul.f32 %v688, 0.5
        %v721 = vmul.f32 %v689, 0.5
        %v722 = vmul.f32 %v690, 0.5
        %v723 = vmul.f32 %v691, 0.5
        %v724 = vmul.f32 %v692, 0.5
        %v725 = vmul.f32 %v693, 0.5
        %v726 = vmul.f32 %v694, 0.5
        %v727 = vmul.f32 %v695, 0.5
        %v728 = vmul.f32 %v696, 0.5
        %v729 = vmul.f32 %v697, 0.5
        %v730 = vmul.f32 %v698, 0.5
        %v731 = vmul.f32 %v699, 0.5
        %v732 = vmul.f32 %v700, 0.5
        %v733 = vmul.f32 %v701, 0.5
        %v734 = vmul.f32 %v702, 0.5
        %v735 = vmul.f32 %v703, 0.5
        %v736 = vmul.f32 %v704, 0.5
        %v737 = vmul.f32 %v705, 0.5
        %v738 = vmul.f32 %v706, 0.5
        %v739 = vmul.f32 %v707, 0.5
        %v740 = vmul.f32 %v708, 0.5
        %v741 = vmul.f32 %v709, 0.5
        %v742 = vmul.f32 %v710, 0.5
        %v743 = vmul.f32 %v711, 0.5
        %v744 = vmul.f32 %v712, 0.5
        %v745 = vmul.f32 %v713, 0.5
        %v746 = vmul.f32 %v714, 0.5
        %v747 = vmul.f32 %v715, 0.5
        %v748 = vadd.f32 %v716, 0.5
        %v749 = vadd.f32 %v717, 0.5
        %v750 = vadd.f32 %v718, 0.5
        %v751 = vadd.f32 %v719, 0.5
        %v752 = vadd.f32 %v720, 0.5
        %v753 = vadd.f32 %v721, 0.5
        %v754 = vadd.f32 %v722, 0.5
        %v755 = vadd.f32 %v723, 0.5
        %v756 = vadd.f32 %v724, 0.5
        %v757 = vadd.f32 %v725, 0.5
        %v758 = vadd.f32 %v726, 0.5
        %v759 = vadd.f32 %v727, 0.5
        %v760 = vadd.f32 %v728, 0.5
        %v761 = vadd.f32 %v729, 0.5
        %v762 = vadd.f32 %v730, 0.5
        %v763 = vadd.f32 %v731, 0.5
        %v764 = vadd.f32 %v732, 0.5
        %v765 = vadd.f32 %v733, 0.5
        %v766 = vadd.f32 %v734, 0.5
        %v767 = vadd.f32 %v735, 0.5
        %v768 = vadd.f32 %v736, 0.5
        %v769 = vadd.f32 %v737, 0.5
        %v770 = vadd.f32 %v738, 0.5
        %v771 = vadd.f32 %v739, 0.5
        %v772 = vadd.f32 %v740, 0.5
        %v773 = vadd.f32 %v741, 0.5
        %v774 = vadd.f32 %v742, 0.5
        %v775 = vadd.f32 %v743, 0.5
        %v776 = vadd.f32 %v744, 0.5
        %v777 = vadd.f32 %v745, 0.5
        %v778 = vadd.f32 %v746, 0.5
        %v779 = vadd.f32 %v747, 0.5
        %v780 = vmul.f32 %v620, %v748
        %v781 = vmul.f32 %v621, %v749
        %v782 = vmul.f32 %v622, %v750
        %v783 = vmul.f32 %v623, %v751
        %v784 = vmul.f32 %v624, %v752
        %v785 = vmul.f32 %v625, %v753
        %v786 = vmul.f32 %v626, %v754
        %v787 = vmul.f32 %v627, %v755
        %v788 = vmul.f32 %v628, %v756
        %v789 = vmul.f32 %v629, %v757
        %v790 = vmul.f32 %v630, %v758
        %v791 = vmul.f32 %v631, %v759
        %v792 = vmul.f32 %v632, %v760
        %v793 = vmul.f32 %v633, %v761
        %v794 = vmul.f32 %v634, %v762
        %v795 = vmul.f32 %v635, %v763
        %v796 = vmul.f32 %v636, %v764
        %v797 = vmul.f32 %v637, %v765
        %v798 = vmul.f32 %v638, %v766
        %v799 = vmul.f32 %v639, %v767
        %v800 = vmul.f32 %v640, %v768
        %v801 = vmul.f32 %v641, %v769
        %v802 = vmul.f32 %v642, %v770
        %v803 = vmul.f32 %v643, %v771
        %v804 = vmul.f32 %v644, %v772
        %v805 = vmul.f32 %v645, %v773
        %v806 = vmul.f32 %v646, %v774
        %v807 = vmul.f32 %v647, %v775
        %v808 = vmul.f32 %v648, %v776
        %v809 = vmul.f32 %v649, %v777
        %v810 = vmul.f32 %v650, %v778
        %v811 = vmul.f32 %v651, %v779
        %v812 = vpack.c.bf16 %v780, %v780
        %v813 = vpack.c.bf16 %v781, %v781
        %v814 = vpack.c.bf16 %v782, %v782
        %v815 = vpack.c.bf16 %v783, %v783
        %v816 = vpack.c.bf16 %v784, %v784
        %v817 = vpack.c.bf16 %v785, %v785
        %v818 = vpack.c.bf16 %v786, %v786
        %v819 = vpack.c.bf16 %v787, %v787
        %v820 = vpack.c.bf16 %v788, %v788
        %v821 = vpack.c.bf16 %v789, %v789
        %v822 = vpack.c.bf16 %v790, %v790
        %v823 = vpack.c.bf16 %v791, %v791
        %v824 = vpack.c.bf16 %v792, %v792
        %v825 = vpack.c.bf16 %v793, %v793
        %v826 = vpack.c.bf16 %v794, %v794
        %v827 = vpack.c.bf16 %v795, %v795
        %v828 = vpack.c.bf16 %v796, %v796
        %v829 = vpack.c.bf16 %v797, %v797
        %v830 = vpack.c.bf16 %v798, %v798
        %v831 = vpack.c.bf16 %v799, %v799
        %v832 = vpack.c.bf16 %v800, %v800
        %v833 = vpack.c.bf16 %v801, %v801
        %v834 = vpack.c.bf16 %v802, %v802
        %v835 = vpack.c.bf16 %v803, %v803
        %v836 = vpack.c.bf16 %v804, %v804
        %v837 = vpack.c.bf16 %v805, %v805
        %v838 = vpack.c.bf16 %v806, %v806
        %v839 = vpack.c.bf16 %v807, %v807
        %v840 = vpack.c.bf16 %v808, %v808
        %v841 = vpack.c.bf16 %v809, %v809
        %v842 = vpack.c.bf16 %v810, %v810
        %v843 = vpack.c.bf16 %v811, %v811
        %844 = vst [vmem:[%s290] sm:$0xf] %v812
        %845 = vst [vmem:[%s290 + $0x4] sm:$0xf] %v813
        %846 = vst [vmem:[%s290 + $0x8] sm:$0xf] %v814
        %847 = vst [vmem:[%s290 + $0xc] sm:$0xf] %v815
        %848 = vst [vmem:[%s290 + $0x10] sm:$0xf] %v816
        %849 = vst [vmem:[%s290 + $0x14] sm:$0xf] %v817
        %850 = vst [vmem:[%s290 + $0x18] sm:$0xf] %v818
        %851 = vst [vmem:[%s290 + $0x1c] sm:$0xf] %v819
        %852 = vst [vmem:[%s290 + $0x20] sm:$0xf] %v820
        %853 = vst [vmem:[%s290 + $0x24] sm:$0xf] %v821
        %854 = vst [vmem:[%s290 + $0x28] sm:$0xf] %v822
        %855 = vst [vmem:[%s290 + $0x2c] sm:$0xf] %v823
        %856 = vst [vmem:[%s290 + $0x30] sm:$0xf] %v824
        %857 = vst [vmem:[%s290 + $0x34] sm:$0xf] %v825
        %858 = vst [vmem:[%s290 + $0x38] sm:$0xf] %v826
        %859 = vst [vmem:[%s290 + $0x3c] sm:$0xf] %v827
        %860 = vst [vmem:[%s290 + $0x40] sm:$0xf] %v828
        %861 = vst [vmem:[%s290 + $0x44] sm:$0xf] %v829
        %862 = vst [vmem:[%s290 + $0x48] sm:$0xf] %v830
        %863 = vst [vmem:[%s290 + $0x4c] sm:$0xf] %v831
        %864 = vst [vmem:[%s290 + $0x50] sm:$0xf] %v832
        %865 = vst [vmem:[%s290 + $0x54] sm:$0xf] %v833
        %866 = vst [vmem:[%s290 + $0x58] sm:$0xf] %v834
        %867 = vst [vmem:[%s290 + $0x5c] sm:$0xf] %v835
        %868 = vst [vmem:[%s290 + $0x60] sm:$0xf] %v836
        %869 = vst [vmem:[%s290 + $0x64] sm:$0xf] %v837
        %870 = vst [vmem:[%s290 + $0x68] sm:$0xf] %v838
        %871 = vst [vmem:[%s290 + $0x6c] sm:$0xf] %v839
        %872 = vst [vmem:[%s290 + $0x70] sm:$0xf] %v840
        %873 = vst [vmem:[%s290 + $0x74] sm:$0xf] %v841
        %874 = vst [vmem:[%s290 + $0x78] sm:$0xf] %v842
        %875 = vst [vmem:[%s290 + $0x7c] sm:$0xf] %v843
        %s876 = sand.u32 %s159, 1
        %s877 = scalar_lea.sflag [#allocation4], %s876
        %s878 = sand.u32 %s159, 1
        %s879 = smul.addr %s878, 128
        %s880 = scalar_lea.vmem [#allocation7], %s879
        // Predicated region
        $region45: #{tpu_custom_call.1} parent=35 // pred_check
          %p881 = pneg %p169
        $region46: #{tpu_custom_call.1} parent=35 // pred_check_branch
          %883 = sbr.rel (%p881) target = $region48
        $region47: #{tpu_custom_call.1} parent=35 // pred_region
          %s884 = smul.u32 32, %s28
          %886 = vsyncadd %s877, 0
          %s887 = sadd.s32 %s29, %s884
          %s888 = smul.addr %s27, 32
          %s889 = sadd.s32 %s887, %s888
          %s890 = smul.addr %s889, 4
          %s891 = scalar_lea.hbm %s4, %s890
          %s892 = sshll.u32 %s880, 4
          %s893 = int_to_ptr.vmem [resolvable:$true] %s892
          %s894 = sshll.u32 %s891, 4
          %s895 = int_to_ptr.hbm [resolvable:$true] %s894
          %900 = dma.vmem_to_hbm [thread:$0]  %s893, 2048, %s895, %s877, 64, 64, 4
        $region48: #{tpu_custom_call.1} parent=35 // pred_fallthru
          _
      $region36: #{tpu_custom_call.1} parent=5 // pred_fallthru
        _
      %p901 = scmp.le.s32.totalorder 2, %s17
      // Predicated region
      $region49: #{tpu_custom_call.1} parent=5 // pred_check
        %p902 = pneg %p901
      $region50: #{tpu_custom_call.1} parent=5 // pred_check_branch
        %904 = sbr.rel (%p902) target = $region52
      $region51: #{tpu_custom_call.1} parent=5 // pred_region
        %s905 = ssub.s32 %s17, 2
        // Predicated region
        $region53: #{tpu_custom_call.1} parent=51 // pred_check
          %p906 = pneg %p175
        $region54: #{tpu_custom_call.1} parent=51 // pred_check_branch
          %908 = sbr.rel (%p906) target = $region56
        $region55: #{tpu_custom_call.1} parent=51 // pred_region
          %s909 = sand.u32 %s160, 1
          %s910 = scalar_lea.sflag [#allocation4], %s909
          %s911 = sand.u32 %s160, 1
          %s912 = smul.addr %s911, 128
          %s913 = scalar_lea.vmem [#allocation7], %s912
          %915 = dma.done %s910, 2048
        $region56: #{tpu_custom_call.1} parent=51 // pred_fallthru
          _
      $region52: #{tpu_custom_call.1} parent=5 // pred_fallthru
        _
    $region6: #{tpu_custom_call.1} parent=1 // loop_footer
      %s21 = sadd.s32 1, %s17
    $region7: #{tpu_custom_call.1} parent=1 // loop_footer_branch
      %16 = sbr.rel target = $region3
    $region8: #{tpu_custom_call.1} parent=1 // loop_exit
      _
    %916 = vsyncpa [#allocation3], 1
    %s917 = scalar_lea.sflag [#allocation3], 1
    %918 = vsyncpa %s917, 1
    %919 = vsyncpa [#allocation6], 1
    %920 = vsyncpa [#allocation4], 1
    %s921 = scalar_lea.sflag [#allocation4], 1
    %922 = vsyncpa %s921, 1

</llo_original>
